<compile_context>
chip_gen: v5e
topology: v5e:2x2
jax: 0.10.0
libtpu: 0.0.40
codegen_flags: <defaults>
</compile_context>

<pallas_src>
import functools

import numpy as np
import jax
import jax.numpy as jnp
from jax.experimental import pallas as pl
from jax.experimental.pallas import tpu as pltpu


def _round_up(v, m):
    return ((v + m - 1) // m) * m


# ------------------------------- kernels ------------------------------------


def _transpose_kernel(x_ref, o_ref, *, pack_k):
    # x_ref: (1, C, T).  o_ref: (1, T, C) or lane-dense (1, T//k, k*C == 128).
    xt = x_ref[0].T                                     # (T, C)
    if pack_k > 1:
        xt = xt.reshape(o_ref.shape[1], o_ref.shape[2])  # row-major repack -> 128 lanes
    o_ref[0] = xt


def _transpose_norm_kernel(x_ref, g_ref, b_ref, o_ref, *, eps, pack_k, real_c):
    # LayerNorm over channels, computed in the (C, T) layout so every reduce /
    # elementwise op runs on 128-lane-dense vregs; one transpose at the end.
    x = x_ref[0].astype(jnp.float32)                    # (C_pad, T)
    inv_c = 1.0 / real_c
    # Wrapper zero-pads extra channels, so the sum is unbiased.
    mean = jnp.sum(x, axis=0, keepdims=True) * inv_c    # (1, T)
    xc = x - mean
    if real_c != x.shape[0]:
        # Mask padded channels out of the variance (they became -mean above).
        ch = jax.lax.broadcasted_iota(jnp.int32, x.shape, 0)
        xc = jnp.where(ch < real_c, xc, 0.0)
    var = jnp.sum(xc * xc, axis=0, keepdims=True) * inv_c   # two-pass: no cancellation
    y = xc * jax.lax.rsqrt(var + eps)
    y = y * g_ref[...] + b_ref[...]                     # f32 params, broadcast over lanes
    yt = y.T.astype(o_ref.dtype)                        # (T, C_pad)
    if pack_k > 1:
        yt = yt.reshape(o_ref.shape[1], o_ref.shape[2])
    o_ref[0] = yt


# --------------------------- sizing helpers ----------------------------------


@functools.lru_cache(maxsize=None)
def _vmem_cap():
    """Per-generation scoped-VMEM ceiling: a fraction of physical VMEM, capped
    at 48 MiB so v7x (64 MiB per TensorCore) keeps Mosaic-internal headroom."""
    try:
        phys = int(pltpu.get_tpu_info().vmem_capacity_bytes)
    except Exception:
        phys = 64 << 20                      # assume v7x-sized VMEM if query fails
    return int(min((phys * 3) // 4, 48 << 20))


def _choose_tile_hw(hw, c, itemsize, batch, per_pos_bytes, target_in_bytes):
    """Byte-targeted HW tile: ~target_in_bytes per (C, T) input buffer, capped by
    the per-generation VMEM budget, a multiple of 128, and small enough to give
    >= 2 grid steps when batch == 1 (v7x megacore)."""
    if hw <= 128:
        return hw                            # single full-extent block
    budget = max(_vmem_cap() - (8 << 20), 8 << 20)
    t = target_in_bytes // max(1, c * itemsize)
    t = min(t, budget // max(1, per_pos_bytes))
    t = min(t, (hw // 128) * 128)            # partial last tile handled by cdiv grid
    t = max(128, (t // 128) * 128)
    if batch == 1:
        t = min(t, max(128, _round_up((hw + 1) // 2, 128)))
    return t


def _can_pack(c, t, hw):
    """Lane-dense output possible: k = 128 // c whole positions per 128-lane row."""
    if c > 64 or c % 8 != 0 or 128 % c != 0:
        return False
    k = 128 // c
    if hw % k != 0 or t % k != 0:
        return False
    return t % 128 == 0 or t == hw


def _build_call(batch, c, hw, dtype, has_norm, eps, t, pack, real_c):
    itemsize = jnp.dtype(dtype).itemsize
    k = 128 // c if pack else 1
    grid = (batch, pl.cdiv(hw, t))

    x_spec = pl.BlockSpec((1, c, t), lambda b, i: (b, 0, i))
    if pack:
        o_spec = pl.BlockSpec((1, t // k, 128), lambda b, i: (b, i, 0))
        out_shape = jax.ShapeDtypeStruct((batch, hw // k, 128), dtype)
        out_tile_bytes = (t // k) * 128 * itemsize
    else:
        o_spec = pl.BlockSpec((1, t, c), lambda b, i: (b, i, 0))
        out_shape = jax.ShapeDtypeStruct((batch, hw, c), dtype)
        out_tile_bytes = t * _round_up(c, 128) * itemsize   # lanes pad to 128 in VMEM

    in_tile_bytes = _round_up(c, 8) * t * itemsize
    temps = 3 * c * t * 4 if has_norm else 0                # f32 x / xc / y intermediates
    need = 2 * (in_tile_bytes + out_tile_bytes) + temps + (4 << 20)

    vmem_limit = None
    if need > (12 << 20):                                   # stay under v5e's 16 MiB default otherwise
        vmem_limit = int(min(max(need, 16 << 20), _vmem_cap()))

    compiler_params = pltpu.CompilerParams(
        dimension_semantics=("parallel", "parallel"),       # megacore-shard B and HW tiles
        vmem_limit_bytes=vmem_limit,
    )

    if has_norm:
        kernel = functools.partial(_transpose_norm_kernel, eps=eps, pack_k=k,
                                   real_c=real_c)
        p_spec = pl.BlockSpec((c, 1), lambda b, i: (0, 0))
        in_specs = [x_spec, p_spec, p_spec]
    else:
        kernel = functools.partial(_transpose_kernel, pack_k=k)
        in_specs = [x_spec]

    return pl.pallas_call(
        kernel,
        out_shape=out_shape,
        grid_spec=pltpu.PrefetchScalarGridSpec(
            num_scalar_prefetch=0,
            grid=grid,
            in_specs=in_specs,
            out_specs=o_spec,
        ),
        compiler_params=compiler_params,
    )


@functools.lru_cache(maxsize=None)
def _pack_lowers(c, t, dtype_name, has_norm):
    """Static capability check, evaluated once per (C, T, dtype, norm) config at
    trace/compile time (so it also works when patch_embed is jitted): verify
    Mosaic can lower the in-kernel (T, C) -> (T//k, 128) repack."""
    dtype = jnp.dtype(dtype_name)
    try:
        call = _build_call(1, c, t, dtype, has_norm, 1e-5, t, True, c)
        x = np.zeros((1, c, t), dtype)
        if has_norm:
            p = np.zeros((c, 1), np.float32)
            jax.jit(call).lower(x, p, p).compile()
        else:
            jax.jit(call).lower(x).compile()
        return True
    except Exception:
        return False


# -------------------------------- wrapper ------------------------------------


def patch_embed(x, gamma=None, beta=None, eps=1e-5, target_tile_bytes=2 << 20):
    """PatchEmbed.forward: (B, C, H, W) -> (B, H*W, C) [+ optional LayerNorm(C)].

    target_tile_bytes sizes the (C, T) input tile (~1-4 MiB amortizes per-grid-
    step overhead and lengthens contiguous DMA bursts on every generation).
    """
    B, C, H, W = x.shape
    HW = H * W
    x2 = x.reshape(B, C, HW)                            # free row-major reshape
    dtype = x2.dtype
    itemsize = jnp.dtype(dtype).itemsize
    has_norm = gamma is not None

    # Pad channels to the 8-sublane granule (e.g. embed_dim=50 -> 56) so every
    # in-kernel tile is aligned; padded channels are zero and sliced off below.
    C_pad = _round_up(max(C, 8), 8)
    if C_pad != C:
        x2 = jnp.pad(x2, ((0, 0), (0, C_pad - C), (0, 0)))

    def per_pos(pack):
        out_lanes = C_pad if pack else _round_up(C_pad, 128)
        pp = 2 * _round_up(C_pad, 8) * itemsize + 2 * out_lanes * itemsize
        if has_norm:
            pp += 3 * C_pad * 4
        return pp

    # Prefer the lane-dense packed output (last dim == 128: unmasked vst, dense
    # VMEM tile); fall back to the plain (B, HW, C) layout otherwise.
    T = _choose_tile_hw(HW, C_pad, itemsize, B, per_pos(True), target_tile_bytes)
    pack = _can_pack(C_pad, T, HW) and _pack_lowers(
        C_pad, T, jnp.dtype(dtype).name, has_norm)
    if not pack:
        T = _choose_tile_hw(HW, C_pad, itemsize, B, per_pos(False), target_tile_bytes)

    call = _build_call(B, C_pad, HW, dtype, has_norm, eps, T, pack, C)
    if has_norm:
        g = jnp.zeros((C_pad, 1), jnp.float32).at[:C, 0].set(
            jnp.asarray(gamma, jnp.float32).reshape(C))
        b = jnp.zeros((C_pad, 1), jnp.float32).at[:C, 0].set(
            jnp.asarray(beta, jnp.float32).reshape(C))
        y = call(x2, g, b)
    else:
        y = call(x2)

    if pack:
        y = y.reshape(B, HW, C_pad)                     # free row-major reshape back
    if C_pad != C:
        y = y[:, :, :C]
    return y


# ------------------------------- reference -----------------------------------


def patch_embed_ref(x, gamma=None, beta=None, eps=1e-5):
    B, C, H, W = x.shape
    y = jnp.transpose(x.reshape(B, C, H * W), (0, 2, 1))       # (B, HW, C)
    if gamma is not None:
        mean = jnp.mean(y, axis=-1, keepdims=True)
        var = jnp.mean((y - mean) ** 2, axis=-1, keepdims=True)
        y = (y - mean) * jax.lax.rsqrt(var + eps)
        y = y * gamma + beta
    return y


# --------------------------------- main ---------------------------------------


if __name__ == "__main__":
    key = jax.random.PRNGKey(0)
    k1, k2, k3 = jax.random.split(key, 3)

    # --- embed_dim=32, 32x32 image: HW=1024, lane-dense k=4 pack --------------
    B, C, H, W = 2, 32, 32, 32
    x_a = jax.random.normal(k1, (B, C, H, W), dtype=jnp.float32)
    out = jax.block_until_ready(patch_embed(x_a))
    assert out.shape == (B, H * W, C)
    assert jnp.allclose(out, patch_embed_ref(x_a)), "transpose path mismatch (C=32)"

    gamma = 1.0 + 0.01 * jnp.arange(C, dtype=jnp.float32)
    beta = 0.05 * jnp.arange(C, dtype=jnp.float32)
    out_n = jax.block_until_ready(patch_embed(x_a, gamma, beta))
    assert jnp.allclose(out_n, patch_embed_ref(x_a, gamma, beta),
                        atol=2e-5, rtol=2e-5), "norm path mismatch (C=32)"

    # --- embed_dim=64, 16x16, batch 1: >=2 HW tiles (v7x megacore), k=2 pack ---
    B2, C2, H2, W2 = 1, 64, 16, 16
    x_b = jax.random.normal(k2, (B2, C2, H2, W2), dtype=jnp.float32)
    out2 = jax.block_until_ready(patch_embed(x_b))
    assert out2.shape == (B2, H2 * W2, C2)
    assert jnp.allclose(out2, patch_embed_ref(x_b)), "transpose path mismatch (C=64)"

    g2 = 1.0 - 0.02 * jnp.arange(C2, dtype=jnp.float32)
    b2 = 0.03 * jnp.arange(C2, dtype=jnp.float32)
    out2n = jax.block_until_ready(patch_embed(x_b, g2, b2))
    assert jnp.allclose(out2n, patch_embed_ref(x_b, g2, b2),
                        atol=2e-5, rtol=2e-5), "norm path mismatch (C=64)"

    # --- embed_dim=50 (module default), 20x20: ragged HW=400, channel pad 50->56
    B3, C3, H3, W3 = 1, 50, 20, 20
    x_c = jax.random.normal(k3, (B3, C3, H3, W3), dtype=jnp.float32)
    out3 = jax.block_until_ready(patch_embed(x_c))
    assert out3.shape == (B3, H3 * W3, C3)
    assert jnp.allclose(out3, patch_embed_ref(x_c)), "transpose path mismatch (C=50)"

    g3 = 1.0 + 0.02 * jnp.arange(C3, dtype=jnp.float32)
    b3 = -0.01 * jnp.arange(C3, dtype=jnp.float32)
    out3n = jax.block_until_ready(patch_embed(x_c, g3, b3))
    assert jnp.allclose(out3n, patch_embed_ref(x_c, g3, b3),
                        atol=2e-5, rtol=2e-5), "norm path mismatch (C=50)"

    print("KERNEL_OK")
</pallas_src>

<mosaic_0001>
module attributes {stable_mosaic.version = 11 : i64} {
  func.func @_transpose_kernel(%arg0: i32, %arg1: i32, %arg2: memref<1x32x1024xf32, #tpu.memory_space<vmem>>, %arg3: memref<1x1024x32xf32, #tpu.memory_space<vmem>>) attributes {dimension_semantics = [#tpu.dimension_semantics<parallel>, #tpu.dimension_semantics<parallel>], iteration_bounds = array<i64: 2, 1>, scalar_prefetch = 0 : i64, scratch_operands = 0 : i64, tpu.core_type = #tpu.core_type<tc>, window_params = [{transform_indices = @transform_0, window_bounds = array<i64: 1, 32, 1024>}, {transform_indices = @transform_1, window_bounds = array<i64: 1, 1024, 32>}]} {
    %c0 = arith.constant 0 : index
    %c0_0 = arith.constant 0 : index
    %c0_1 = arith.constant 0 : index
    %0 = vector.load %arg2[%c0, %c0_0, %c0_1] : memref<1x32x1024xf32, #tpu.memory_space<vmem>>, vector<1x32x1024xf32>
    %1 = vector.shape_cast %0 : vector<1x32x1024xf32> to vector<32x1024xf32>
    %2 = tpu.transpose %1, [1, 0] : vector<32x1024xf32> -> vector<1024x32xf32>
    %c0_2 = arith.constant 0 : index
    %c0_3 = arith.constant 0 : index
    %c0_4 = arith.constant 0 : index
    %3 = vector.load %arg3[%c0_2, %c0_3, %c0_4] : memref<1x1024x32xf32, #tpu.memory_space<vmem>>, vector<1x1024x32xf32>
    %4 = vector.shape_cast %3 : vector<1x1024x32xf32> to vector<1024x32xf32>
    %5 = vector.shape_cast %2 : vector<1024x32xf32> to vector<1x1024x32xf32>
    tpu.vector_store %arg3[%c0_2, %c0_3, %c0_4], %5 {strides = array<i32>} : memref<1x1024x32xf32, #tpu.memory_space<vmem>>, vector<1x1024x32xf32>,
    return
  }
  func.func @transform_0(%arg0: i32, %arg1: i32) -> (i32, i32, i32) {
    %c0_i32 = arith.constant 0 : i32
    %c0_i32_0 = arith.constant 0 : i32
    return %arg0, %c0_i32, %arg1 : i32, i32, i32
  }
  func.func @transform_1(%arg0: i32, %arg1: i32) -> (i32, i32, i32) {
    %c0_i32 = arith.constant 0 : i32
    %c0_i32_0 = arith.constant 0 : i32
    return %arg0, %arg1, %c0_i32 : i32, i32, i32
  }
}

</mosaic_0001>

<llo_original>
// kernel: tpu_custom_call.1
$region0: #{tpu_custom_call.1}
  #allocation0 [shape = 'u32[]', space=smem, size = 0x4, offset = 0x4, fixed_abs, tag = 'smem constant byte address 0x4 - core index']
  #allocation1 [shape = 'u32[72,128]{1,0:T(1,128)}', space=vmem, size = 0x9000, scoped, tag = 'internal scratch']
  %s0 = inlined_call_operand.hbm [shape: f32[2,32,1024], index: 0, kind: input, shape index: {}]
  %s1 = inlined_call_operand.vmem [shape: f32[2,1024,32], index: 1, kind: output, shape index: {}]
  %s2 = sld [smem:[#allocation0]]
  $region41: #{tpu_custom_call.1} parent=0
    _
  %s4 = ssub.s32 1, %s2
  %s5 = scalar_select 0, %s4, %s2
  $region1: #{tpu_custom_call.1} parent=0
    #allocation2 [shape = 'u8[262144]{0}', space=vmem, size = 0x40000, scoped, tag = 'input window, operand 0']
    #allocation3 [shape = 's32[2]{0}', space=sflag, size = 0x8, scoped, tag = 'scoped memory for tpu_custom_call.1']
    %6 = vsyncpa [#allocation3], 0
    %s7 = scalar_lea.sflag [#allocation3], 1
    %8 = vsyncpa %s7, 0
    loop: start=0, step=1, limit=4
    $region2: #{tpu_custom_call.1} parent=1 // loop_pre_header
      _
    $region3: #{tpu_custom_call.1} parent=1 // loop_header
      %s10 = sphi 0, %s14
      %p11 = scmp.ge.s32.totalorder %s10, 4
      %s17 = sphi 0, %s29
      %s18 = sphi 0, %s25
      %s19 = sphi 0, %s17
      %s20 = sphi 0, %s18
      %s21 = sphi 0, %s19
      %s22 = sphi 0, %s20
      %s34 = sphi 0, %s36
      %s37 = sphi 0, %s34
      %s38 = sphi 0, %s37
      %s54 = sphi 0, %s38
      %s62 = sphi 0, %s64
      %s65 = sphi 0, %s62
      %s66 = sphi 0, %s65
      %s82 = sphi 0, %s66
    $region4: #{tpu_custom_call.1} parent=1 // loop_header_branch
      %13 = sbr.rel (%p11) target = $region8
    $region5: #{tpu_custom_call.1} parent=1 // loop_body
      %s15 = ssub.s32 %s10, 1
      %s16 = ssub.s32 %s10, 2
      %s23 = sadd.s32 1, %s18
      %p24 = scmp.ge.s32.totalorder %s23, 1
      %s25 = scalar_select %p24, 0, %s23
      %s26 = sadd.s32 1, %s17
      %s27 = scalar_select %p24, %s26, %s17
      %p28 = scmp.ge.s32.totalorder %s27, 2
      %s29 = scalar_select %p28, 0, %s27
      %s30 = ssub.s32 %s17, %s29
      %s31 = ssub.s32 %s18, %s25
      %s32 = sor.u32 %s30, %s31
      %p33 = scmp.eq.s32.totalorder %s32, 0
      %s35 = sadd.s32 %s34, 1
      %s36 = scalar_select %p33, %s34, %s35
      %p39 = pneg %p33
      %p40 = scmp.eq.s32.totalorder %s10, 1
      %p41 = por %p39, %p40
      %p42 = scmp.ne.s32.totalorder %s34, %s37
      %p43 = scmp.eq.s32.totalorder %s10, 0
      %p44 = por %p42, %p43
      %p45 = scmp.ne.s32.totalorder %s34, %s37
      %p46 = scmp.eq.s32.totalorder %s15, 1
      %p47 = por %p45, %p46
      %p48 = scmp.ne.s32.totalorder %s37, %s38
      %p49 = scmp.eq.s32.totalorder %s15, 0
      %p50 = por %p48, %p49
      %p51 = scmp.ne.s32.totalorder %s37, %s38
      %p52 = scmp.eq.s32.totalorder %s16, 1
      %p53 = por %p51, %p52
      %p55 = scmp.ne.s32.totalorder %s38, %s54
      %p56 = scmp.eq.s32.totalorder %s16, 0
      %p57 = por %p55, %p56
      %s58 = ssub.s32 %s17, %s29
      %s59 = ssub.s32 %s18, %s25
      %s60 = sor.u32 %s58, %s59
      %p61 = scmp.eq.s32.totalorder %s60, 0
      %s63 = sadd.s32 %s62, 1
      %s64 = scalar_select %p61, %s62, %s63
      %p67 = pneg %p61
      %p68 = scmp.eq.s32.totalorder %s10, 1
      %p69 = por %p67, %p68
      %p70 = scmp.ne.s32.totalorder %s62, %s65
      %p71 = scmp.eq.s32.totalorder %s10, 0
      %p72 = por %p70, %p71
      %p73 = scmp.ne.s32.totalorder %s62, %s65
      %p74 = scmp.eq.s32.totalorder %s15, 1
      %p75 = por %p73, %p74
      %p76 = scmp.ne.s32.totalorder %s65, %s66
      %p77 = scmp.eq.s32.totalorder %s15, 0
      %p78 = por %p76, %p77
      %p79 = scmp.ne.s32.totalorder %s65, %s66
      %p80 = scmp.eq.s32.totalorder %s16, 1
      %p81 = por %p79, %p80
      %p83 = scmp.ne.s32.totalorder %s66, %s82
      %p84 = scmp.eq.s32.totalorder %s16, 0
      %p85 = por %p83, %p84
      %p86 = scmp.le.s32.totalorder 1, %s10
      %p87 = scmp.lt.s32.totalorder %s10, 3
      %p88 = pnand %p86, %p87
      %p89 = pneg %p88
      // Predicated region
      $region9: #{tpu_custom_call.1} parent=5 // pred_check
        _
      $region10: #{tpu_custom_call.1} parent=5 // pred_check_branch
        %91 = sbr.rel (%p88) target = $region12
      $region11: #{tpu_custom_call.1} parent=5 // pred_region
        %s92 = ssub.s32 %s10, 1
      $region12: #{tpu_custom_call.1} parent=5 // pred_fallthru
        _
      %p93 = scmp.lt.s32.totalorder %s10, 2
      // Predicated region
      $region13: #{tpu_custom_call.1} parent=5 // pred_check
        %p94 = pneg %p93
      $region14: #{tpu_custom_call.1} parent=5 // pred_check_branch
        %96 = sbr.rel (%p94) target = $region16
      $region15: #{tpu_custom_call.1} parent=5 // pred_region
        // Predicated region
        $region17: #{tpu_custom_call.1} parent=15 // pred_check
          %p97 = pneg %p44
        $region18: #{tpu_custom_call.1} parent=15 // pred_check_branch
          %99 = sbr.rel (%p97) target = $region20
        $region19: #{tpu_custom_call.1} parent=15 // pred_region
          %s100 = sand.u32 %s34, 1
          %s101 = scalar_lea.sflag [#allocation3], %s100
          %s102 = sand.u32 %s34, 1
          %s103 = smul.addr %s102, 256
          %s104 = scalar_lea.vmem [#allocation2], %s103
          %s105 = smul.u32 8, %s18
          %107 = vsyncadd %s101, 0
          %s108 = smul.addr %s17, 32
          %s109 = sadd.s32 %s105, %s108
          %s110 = smul.addr %s109, 8
          %s111 = scalar_lea.hbm %s0, %s110
          %s112 = sshll.u32 %s111, 4
          %s113 = int_to_ptr.hbm [resolvable:$true] %s112
          %s114 = sshll.u32 %s104, 4
          %s115 = int_to_ptr.vmem [resolvable:$true] %s114
          %120 = dma.hbm_to_vmem [thread:$0]  %s113, 4096, %s115, %s101, 1024, 1024, 64
        $region20: #{tpu_custom_call.1} parent=15 // pred_fallthru
          _
      $region16: #{tpu_custom_call.1} parent=5 // pred_fallthru
        _
      %p121 = scmp.le.s32.totalorder 1, %s10
      %p122 = scmp.lt.s32.totalorder %s10, 3
      %p123 = pnand %p121, %p122
      %p124 = pneg %p123
      // Predicated region
      $region21: #{tpu_custom_call.1} parent=5 // pred_check
        _
      $region22: #{tpu_custom_call.1} parent=5 // pred_check_branch
        %126 = sbr.rel (%p123) target = $region24
      $region23: #{tpu_custom_call.1} parent=5 // pred_region
        %s127 = ssub.s32 %s10, 1
        %s128 = sand.u32 %s37, 1
        %s129 = scalar_lea.sflag [#allocation3], %s128
        %s130 = sand.u32 %s37, 1
        %s131 = smul.addr %s130, 256
        %s132 = scalar_lea.vmem [#allocation2], %s131
        // Predicated region
        $region25: #{tpu_custom_call.1} parent=23 // pred_check
          %p133 = pneg %p50
        $region26: #{tpu_custom_call.1} parent=23 // pred_check_branch
          %135 = sbr.rel (%p133) target = $region28
        $region27: #{tpu_custom_call.1} parent=23 // pred_region
          %137 = dma.done %s129, 4096
        $region28: #{tpu_custom_call.1} parent=23 // pred_fallthru
          _
        %s138 = sand.u32 %s37, 1
        %s139 = scalar_lea.sflag [#allocation3], %s138
        %s140 = sand.u32 %s37, 1
        %s141 = smul.addr %s140, 256
        %s142 = scalar_lea.vmem [#allocation2], %s141
        %p143 = pneg %p50
        %p144 = pneg %p47
        %p145 = pneg %p78
        %p146 = pneg %p75
        %s147 = smul.u32 128, %s20
        %p148 = scmp.lt.s32.totalorder %s19, 1
        %s149 = scalar_select %p148, %s19, 1
        %p150 = scmp.lt.s32.totalorder %s147, 127
        %s151 = scalar_select %p150, %s147, 127
        %s152 = smul.addr %s149, 128
        %s153 = sadd.s32 %s151, %s152
        %s154 = smul.addr %s153, 8
        %s155 = scalar_lea.vmem %s1, %s154
        %s156 = smul.u32 8, %s20
        %s157 = smul.u32 128, %s20
        %p158 = scmp.lt.s32.totalorder %s19, 1
        %s159 = scalar_select %p158, %s19, 1
        %p160 = scmp.lt.s32.totalorder %s157, 127
        %s161 = scalar_select %p160, %s157, 127
        %s162 = smul.addr %s159, 128
        %s163 = sadd.s32 %s161, %s162
        %s164 = smul.addr %s163, 8
        %s165 = scalar_lea.vmem %s1, %s164
        %s166 = smul.u32 128, %s20
        %v167 = vld [vmem:[%s132] sm:$0xff]
        %v168 = vld [vmem:[%s132 + $0x8] sm:$0xff]
        %v169 = vld [vmem:[%s132 + $0x10] sm:$0xff]
        %v170 = vld [vmem:[%s132 + $0x18] sm:$0xff]
        %v171 = vld [vmem:[%s132 + $0x20] sm:$0xff]
        %v172 = vld [vmem:[%s132 + $0x28] sm:$0xff]
        %v173 = vld [vmem:[%s132 + $0x30] sm:$0xff]
        %v174 = vld [vmem:[%s132 + $0x38] sm:$0xff]
        %v175 = vld [vmem:[%s132 + $0x40] sm:$0xff]
        %v176 = vld [vmem:[%s132 + $0x48] sm:$0xff]
        %v177 = vld [vmem:[%s132 + $0x50] sm:$0xff]
        %v178 = vld [vmem:[%s132 + $0x58] sm:$0xff]
        %v179 = vld [vmem:[%s132 + $0x60] sm:$0xff]
        %v180 = vld [vmem:[%s132 + $0x68] sm:$0xff]
        %v181 = vld [vmem:[%s132 + $0x70] sm:$0xff]
        %v182 = vld [vmem:[%s132 + $0x78] sm:$0xff]
        %v183 = vld [vmem:[%s132 + $0x80] sm:$0xff]
        %v184 = vld [vmem:[%s132 + $0x88] sm:$0xff]
        %v185 = vld [vmem:[%s132 + $0x90] sm:$0xff]
        %v186 = vld [vmem:[%s132 + $0x98] sm:$0xff]
        %v187 = vld [vmem:[%s132 + $0xa0] sm:$0xff]
        %v188 = vld [vmem:[%s132 + $0xa8] sm:$0xff]
        %v189 = vld [vmem:[%s132 + $0xb0] sm:$0xff]
        %v190 = vld [vmem:[%s132 + $0xb8] sm:$0xff]
        %v191 = vld [vmem:[%s132 + $0xc0] sm:$0xff]
        %v192 = vld [vmem:[%s132 + $0xc8] sm:$0xff]
        %v193 = vld [vmem:[%s132 + $0xd0] sm:$0xff]
        %v194 = vld [vmem:[%s132 + $0xd8] sm:$0xff]
        %v195 = vld [vmem:[%s132 + $0xe0] sm:$0xff]
        %v196 = vld [vmem:[%s132 + $0xe8] sm:$0xff]
        %v197 = vld [vmem:[%s132 + $0xf0] sm:$0xff]
        %v198 = vld [vmem:[%s132 + $0xf8] sm:$0xff]
        %199 = vxpose.xlu0.b32.start [1/16] %v167, 128
        %200 = vxpose.xlu0.b32.cont [2/16] %v175, 128
        %201 = vxpose.xlu0.b32.cont [3/16] %v183, 128
        %202 = vxpose.xlu0.b32.cont [4/16] %v191, 128
        %203 = vxpose.xlu0.b32.cont [5/16] 0.0, 128
        %204 = vxpose.xlu0.b32.cont [6/16] 0.0, 128
        %205 = vxpose.xlu0.b32.cont [7/16] 0.0, 128
        %206 = vxpose.xlu0.b32.cont [8/16] 0.0, 128
        %207 = vxpose.xlu0.b32.cont [9/16] 0.0, 128
        %208 = vxpose.xlu0.b32.cont [10/16] 0.0, 128
        %209 = vxpose.xlu0.b32.cont [11/16] 0.0, 128
        %210 = vxpose.xlu0.b32.cont [12/16] 0.0, 128
        %211 = vxpose.xlu0.b32.cont [13/16] 0.0, 128
        %212 = vxpose.xlu0.b32.cont [14/16] 0.0, 128
        %213 = vxpose.xlu0.b32.cont [15/16] 0.0, 128
        %214 = vxpose.xlu0.b32.end [16/16] 0.0, 128
        %v215 = vpop.trf.xlu0
        %v216 = vpop.trf.xlu0
        %v217 = vpop.trf.xlu0
        %v218 = vpop.trf.xlu0
        %v219 = vpop.trf.xlu0
        %v220 = vpop.trf.xlu0
        %v221 = vpop.trf.xlu0
        %v222 = vpop.trf.xlu0
        %v223 = vpop.trf.xlu0
        %v224 = vpop.trf.xlu0
        %v225 = vpop.trf.xlu0
        %v226 = vpop.trf.xlu0
        %v227 = vpop.trf.xlu0
        %v228 = vpop.trf.xlu0
        %v229 = vpop.trf.xlu0
        %v230 = vpop.trf.xlu0
        %231 = vxpose.xlu0.b32.start [1/16] %v168, 128
        %232 = vxpose.xlu0.b32.cont [2/16] %v176, 128
        %233 = vxpose.xlu0.b32.cont [3/16] %v184, 128
        %234 = vxpose.xlu0.b32.cont [4/16] %v192, 128
        %235 = vxpose.xlu0.b32.cont [5/16] 0.0, 128
        %236 = vxpose.xlu0.b32.cont [6/16] 0.0, 128
        %237 = vxpose.xlu0.b32.cont [7/16] 0.0, 128
        %238 = vxpose.xlu0.b32.cont [8/16] 0.0, 128
        %239 = vxpose.xlu0.b32.cont [9/16] 0.0, 128
        %240 = vxpose.xlu0.b32.cont [10/16] 0.0, 128
        %241 = vxpose.xlu0.b32.cont [11/16] 0.0, 128
        %242 = vxpose.xlu0.b32.cont [12/16] 0.0, 128
        %243 = vxpose.xlu0.b32.cont [13/16] 0.0, 128
        %244 = vxpose.xlu0.b32.cont [14/16] 0.0, 128
        %245 = vxpose.xlu0.b32.cont [15/16] 0.0, 128
        %246 = vxpose.xlu0.b32.end [16/16] 0.0, 128
        %v247 = vpop.trf.xlu0
        %v248 = vpop.trf.xlu0
        %v249 = vpop.trf.xlu0
        %v250 = vpop.trf.xlu0
        %v251 = vpop.trf.xlu0
        %v252 = vpop.trf.xlu0
        %v253 = vpop.trf.xlu0
        %v254 = vpop.trf.xlu0
        %v255 = vpop.trf.xlu0
        %v256 = vpop.trf.xlu0
        %v257 = vpop.trf.xlu0
        %v258 = vpop.trf.xlu0
        %v259 = vpop.trf.xlu0
        %v260 = vpop.trf.xlu0
        %v261 = vpop.trf.xlu0
        %v262 = vpop.trf.xlu0
        %263 = vxpose.xlu0.b32.start [1/16] %v169, 128
        %264 = vxpose.xlu0.b32.cont [2/16] %v177, 128
        %265 = vxpose.xlu0.b32.cont [3/16] %v185, 128
        %266 = vxpose.xlu0.b32.cont [4/16] %v193, 128
        %267 = vxpose.xlu0.b32.cont [5/16] 0.0, 128
        %268 = vxpose.xlu0.b32.cont [6/16] 0.0, 128
        %269 = vxpose.xlu0.b32.cont [7/16] 0.0, 128
        %270 = vxpose.xlu0.b32.cont [8/16] 0.0, 128
        %271 = vxpose.xlu0.b32.cont [9/16] 0.0, 128
        %272 = vxpose.xlu0.b32.cont [10/16] 0.0, 128
        %273 = vxpose.xlu0.b32.cont [11/16] 0.0, 128
        %274 = vxpose.xlu0.b32.cont [12/16] 0.0, 128
        %275 = vxpose.xlu0.b32.cont [13/16] 0.0, 128
        %276 = vxpose.xlu0.b32.cont [14/16] 0.0, 128
        %277 = vxpose.xlu0.b32.cont [15/16] 0.0, 128
        %278 = vxpose.xlu0.b32.end [16/16] 0.0, 128
        %v279 = vpop.trf.xlu0
        %v280 = vpop.trf.xlu0
        %v281 = vpop.trf.xlu0
        %v282 = vpop.trf.xlu0
        %v283 = vpop.trf.xlu0
        %v284 = vpop.trf.xlu0
        %v285 = vpop.trf.xlu0
        %v286 = vpop.trf.xlu0
        %v287 = vpop.trf.xlu0
        %v288 = vpop.trf.xlu0
        %v289 = vpop.trf.xlu0
        %v290 = vpop.trf.xlu0
        %v291 = vpop.trf.xlu0
        %v292 = vpop.trf.xlu0
        %v293 = vpop.trf.xlu0
        %v294 = vpop.trf.xlu0
        %295 = vxpose.xlu0.b32.start [1/16] %v170, 128
        %296 = vxpose.xlu0.b32.cont [2/16] %v178, 128
        %297 = vxpose.xlu0.b32.cont [3/16] %v186, 128
        %298 = vxpose.xlu0.b32.cont [4/16] %v194, 128
        %299 = vxpose.xlu0.b32.cont [5/16] 0.0, 128
        %300 = vxpose.xlu0.b32.cont [6/16] 0.0, 128
        %301 = vxpose.xlu0.b32.cont [7/16] 0.0, 128
        %302 = vxpose.xlu0.b32.cont [8/16] 0.0, 128
        %303 = vxpose.xlu0.b32.cont [9/16] 0.0, 128
        %304 = vxpose.xlu0.b32.cont [10/16] 0.0, 128
        %305 = vxpose.xlu0.b32.cont [11/16] 0.0, 128
        %306 = vxpose.xlu0.b32.cont [12/16] 0.0, 128
        %307 = vxpose.xlu0.b32.cont [13/16] 0.0, 128
        %308 = vxpose.xlu0.b32.cont [14/16] 0.0, 128
        %309 = vxpose.xlu0.b32.cont [15/16] 0.0, 128
        %310 = vxpose.xlu0.b32.end [16/16] 0.0, 128
        %v311 = vpop.trf.xlu0
        %v312 = vpop.trf.xlu0
        %v313 = vpop.trf.xlu0
        %v314 = vpop.trf.xlu0
        %v315 = vpop.trf.xlu0
        %v316 = vpop.trf.xlu0
        %v317 = vpop.trf.xlu0
        %v318 = vpop.trf.xlu0
        %v319 = vpop.trf.xlu0
        %v320 = vpop.trf.xlu0
        %v321 = vpop.trf.xlu0
        %v322 = vpop.trf.xlu0
        %v323 = vpop.trf.xlu0
        %v324 = vpop.trf.xlu0
        %v325 = vpop.trf.xlu0
        %v326 = vpop.trf.xlu0
        %327 = vxpose.xlu0.b32.start [1/16] %v171, 128
        %328 = vxpose.xlu0.b32.cont [2/16] %v179, 128
        %329 = vxpose.xlu0.b32.cont [3/16] %v187, 128
        %330 = vxpose.xlu0.b32.cont [4/16] %v195, 128
        %331 = vxpose.xlu0.b32.cont [5/16] 0.0, 128
        %332 = vxpose.xlu0.b32.cont [6/16] 0.0, 128
        %333 = vxpose.xlu0.b32.cont [7/16] 0.0, 128
        %334 = vxpose.xlu0.b32.cont [8/16] 0.0, 128
        %335 = vxpose.xlu0.b32.cont [9/16] 0.0, 128
        %336 = vxpose.xlu0.b32.cont [10/16] 0.0, 128
        %337 = vxpose.xlu0.b32.cont [11/16] 0.0, 128
        %338 = vxpose.xlu0.b32.cont [12/16] 0.0, 128
        %339 = vxpose.xlu0.b32.cont [13/16] 0.0, 128
        %340 = vxpose.xlu0.b32.cont [14/16] 0.0, 128
        %341 = vxpose.xlu0.b32.cont [15/16] 0.0, 128
        %342 = vxpose.xlu0.b32.end [16/16] 0.0, 128
        %v343 = vpop.trf.xlu0
        %v344 = vpop.trf.xlu0
        %v345 = vpop.trf.xlu0
        %v346 = vpop.trf.xlu0
        %v347 = vpop.trf.xlu0
        %v348 = vpop.trf.xlu0
        %v349 = vpop.trf.xlu0
        %v350 = vpop.trf.xlu0
        %v351 = vpop.trf.xlu0
        %v352 = vpop.trf.xlu0
        %v353 = vpop.trf.xlu0
        %v354 = vpop.trf.xlu0
        %v355 = vpop.trf.xlu0
        %v356 = vpop.trf.xlu0
        %v357 = vpop.trf.xlu0
        %v358 = vpop.trf.xlu0
        %359 = vxpose.xlu0.b32.start [1/16] %v172, 128
        %360 = vxpose.xlu0.b32.cont [2/16] %v180, 128
        %361 = vxpose.xlu0.b32.cont [3/16] %v188, 128
        %362 = vxpose.xlu0.b32.cont [4/16] %v196, 128
        %363 = vxpose.xlu0.b32.cont [5/16] 0.0, 128
        %364 = vxpose.xlu0.b32.cont [6/16] 0.0, 128
        %365 = vxpose.xlu0.b32.cont [7/16] 0.0, 128
        %366 = vxpose.xlu0.b32.cont [8/16] 0.0, 128
        %367 = vxpose.xlu0.b32.cont [9/16] 0.0, 128
        %368 = vxpose.xlu0.b32.cont [10/16] 0.0, 128
        %369 = vxpose.xlu0.b32.cont [11/16] 0.0, 128
        %370 = vxpose.xlu0.b32.cont [12/16] 0.0, 128
        %371 = vxpose.xlu0.b32.cont [13/16] 0.0, 128
        %372 = vxpose.xlu0.b32.cont [14/16] 0.0, 128
        %373 = vxpose.xlu0.b32.cont [15/16] 0.0, 128
        %374 = vxpose.xlu0.b32.end [16/16] 0.0, 128
        %v375 = vpop.trf.xlu0
        %v376 = vpop.trf.xlu0
        %v377 = vpop.trf.xlu0
        %v378 = vpop.trf.xlu0
        %v379 = vpop.trf.xlu0
        %v380 = vpop.trf.xlu0
        %v381 = vpop.trf.xlu0
        %v382 = vpop.trf.xlu0
        %v383 = vpop.trf.xlu0
        %v384 = vpop.trf.xlu0
        %v385 = vpop.trf.xlu0
        %v386 = vpop.trf.xlu0
        %v387 = vpop.trf.xlu0
        %v388 = vpop.trf.xlu0
        %v389 = vpop.trf.xlu0
        %v390 = vpop.trf.xlu0
        %391 = vxpose.xlu0.b32.start [1/16] %v173, 128
        %392 = vxpose.xlu0.b32.cont [2/16] %v181, 128
        %393 = vxpose.xlu0.b32.cont [3/16] %v189, 128
        %394 = vxpose.xlu0.b32.cont [4/16] %v197, 128
        %395 = vxpose.xlu0.b32.cont [5/16] 0.0, 128
        %396 = vxpose.xlu0.b32.cont [6/16] 0.0, 128
        %397 = vxpose.xlu0.b32.cont [7/16] 0.0, 128
        %398 = vxpose.xlu0.b32.cont [8/16] 0.0, 128
        %399 = vxpose.xlu0.b32.cont [9/16] 0.0, 128
        %400 = vxpose.xlu0.b32.cont [10/16] 0.0, 128
        %401 = vxpose.xlu0.b32.cont [11/16] 0.0, 128
        %402 = vxpose.xlu0.b32.cont [12/16] 0.0, 128
        %403 = vxpose.xlu0.b32.cont [13/16] 0.0, 128
        %404 = vxpose.xlu0.b32.cont [14/16] 0.0, 128
        %405 = vxpose.xlu0.b32.cont [15/16] 0.0, 128
        %406 = vxpose.xlu0.b32.end [16/16] 0.0, 128
        %v407 = vpop.trf.xlu0
        %v408 = vpop.trf.xlu0
        %v409 = vpop.trf.xlu0
        %v410 = vpop.trf.xlu0
        %v411 = vpop.trf.xlu0
        %v412 = vpop.trf.xlu0
        %v413 = vpop.trf.xlu0
        %v414 = vpop.trf.xlu0
        %v415 = vpop.trf.xlu0
        %v416 = vpop.trf.xlu0
        %v417 = vpop.trf.xlu0
        %v418 = vpop.trf.xlu0
        %v419 = vpop.trf.xlu0
        %v420 = vpop.trf.xlu0
        %v421 = vpop.trf.xlu0
        %v422 = vpop.trf.xlu0
        %423 = vxpose.xlu0.b32.start [1/16] %v174, 128
        %424 = vxpose.xlu0.b32.cont [2/16] %v182, 128
        %425 = vxpose.xlu0.b32.cont [3/16] %v190, 128
        %426 = vxpose.xlu0.b32.cont [4/16] %v198, 128
        %427 = vxpose.xlu0.b32.cont [5/16] 0.0, 128
        %428 = vxpose.xlu0.b32.cont [6/16] 0.0, 128
        %429 = vxpose.xlu0.b32.cont [7/16] 0.0, 128
        %430 = vxpose.xlu0.b32.cont [8/16] 0.0, 128
        %431 = vxpose.xlu0.b32.cont [9/16] 0.0, 128
        %432 = vxpose.xlu0.b32.cont [10/16] 0.0, 128
        %433 = vxpose.xlu0.b32.cont [11/16] 0.0, 128
        %434 = vxpose.xlu0.b32.cont [12/16] 0.0, 128
        %435 = vxpose.xlu0.b32.cont [13/16] 0.0, 128
        %436 = vxpose.xlu0.b32.cont [14/16] 0.0, 128
        %437 = vxpose.xlu0.b32.cont [15/16] 0.0, 128
        %438 = vxpose.xlu0.b32.end [16/16] 0.0, 128
        %v439 = vpop.trf.xlu0
        %v440 = vpop.trf.xlu0
        %v441 = vpop.trf.xlu0
        %v442 = vpop.trf.xlu0
        %v443 = vpop.trf.xlu0
        %v444 = vpop.trf.xlu0
        %v445 = vpop.trf.xlu0
        %v446 = vpop.trf.xlu0
        %v447 = vpop.trf.xlu0
        %v448 = vpop.trf.xlu0
        %v449 = vpop.trf.xlu0
        %v450 = vpop.trf.xlu0
        %v451 = vpop.trf.xlu0
        %v452 = vpop.trf.xlu0
        %v453 = vpop.trf.xlu0
        %v454 = vpop.trf.xlu0
        %vm455 = vcmask 261120
        %456 = vst.msk [vmem:[%s165] sm:$0xff] %vm455, %v215
        %457 = vst.msk [vmem:[%s165 + $0x8] sm:$0xff] %vm455, %v216
        %458 = vst.msk [vmem:[%s165 + $0x10] sm:$0xff] %vm455, %v217
        %459 = vst.msk [vmem:[%s165 + $0x18] sm:$0xff] %vm455, %v218
        %460 = vst.msk [vmem:[%s165 + $0x20] sm:$0xff] %vm455, %v219
        %461 = vst.msk [vmem:[%s165 + $0x28] sm:$0xff] %vm455, %v220
        %462 = vst.msk [vmem:[%s165 + $0x30] sm:$0xff] %vm455, %v221
        %463 = vst.msk [vmem:[%s165 + $0x38] sm:$0xff] %vm455, %v222
        %464 = vst.msk [vmem:[%s165 + $0x40] sm:$0xff] %vm455, %v223
        %465 = vst.msk [vmem:[%s165 + $0x48] sm:$0xff] %vm455, %v224
        %466 = vst.msk [vmem:[%s165 + $0x50] sm:$0xff] %vm455, %v225
        %467 = vst.msk [vmem:[%s165 + $0x58] sm:$0xff] %vm455, %v226
        %468 = vst.msk [vmem:[%s165 + $0x60] sm:$0xff] %vm455, %v227
        %469 = vst.msk [vmem:[%s165 + $0x68] sm:$0xff] %vm455, %v228
        %470 = vst.msk [vmem:[%s165 + $0x70] sm:$0xff] %vm455, %v229
        %471 = vst.msk [vmem:[%s165 + $0x78] sm:$0xff] %vm455, %v230
        %472 = vst.msk [vmem:[%s165 + $0x80] sm:$0xff] %vm455, %v247
        %473 = vst.msk [vmem:[%s165 + $0x88] sm:$0xff] %vm455, %v248
        %474 = vst.msk [vmem:[%s165 + $0x90] sm:$0xff] %vm455, %v249
        %475 = vst.msk [vmem:[%s165 + $0x98] sm:$0xff] %vm455, %v250
        %476 = vst.msk [vmem:[%s165 + $0xa0] sm:$0xff] %vm455, %v251
        %477 = vst.msk [vmem:[%s165 + $0xa8] sm:$0xff] %vm455, %v252
        %478 = vst.msk [vmem:[%s165 + $0xb0] sm:$0xff] %vm455, %v253
        %479 = vst.msk [vmem:[%s165 + $0xb8] sm:$0xff] %vm455, %v254
        %480 = vst.msk [vmem:[%s165 + $0xc0] sm:$0xff] %vm455, %v255
        %481 = vst.msk [vmem:[%s165 + $0xc8] sm:$0xff] %vm455, %v256
        %482 = vst.msk [vmem:[%s165 + $0xd0] sm:$0xff] %vm455, %v257
        %483 = vst.msk [vmem:[%s165 + $0xd8] sm:$0xff] %vm455, %v258
        %484 = vst.msk [vmem:[%s165 + $0xe0] sm:$0xff] %vm455, %v259
        %485 = vst.msk [vmem:[%s165 + $0xe8] sm:$0xff] %vm455, %v260
        %486 = vst.msk [vmem:[%s165 + $0xf0] sm:$0xff] %vm455, %v261
        %487 = vst.msk [vmem:[%s165 + $0xf8] sm:$0xff] %vm455, %v262
        %488 = vst.msk [vmem:[%s165 + $0x100] sm:$0xff] %vm455, %v279
        %489 = vst.msk [vmem:[%s165 + $0x108] sm:$0xff] %vm455, %v280
        %490 = vst.msk [vmem:[%s165 + $0x110] sm:$0xff] %vm455, %v281
        %491 = vst.msk [vmem:[%s165 + $0x118] sm:$0xff] %vm455, %v282
        %492 = vst.msk [vmem:[%s165 + $0x120] sm:$0xff] %vm455, %v283
        %493 = vst.msk [vmem:[%s165 + $0x128] sm:$0xff] %vm455, %v284
        %494 = vst.msk [vmem:[%s165 + $0x130] sm:$0xff] %vm455, %v285
        %495 = vst.msk [vmem:[%s165 + $0x138] sm:$0xff] %vm455, %v286
        %496 = vst.msk [vmem:[%s165 + $0x140] sm:$0xff] %vm455, %v287
        %497 = vst.msk [vmem:[%s165 + $0x148] sm:$0xff] %vm455, %v288
        %498 = vst.msk [vmem:[%s165 + $0x150] sm:$0xff] %vm455, %v289
        %499 = vst.msk [vmem:[%s165 + $0x158] sm:$0xff] %vm455, %v290
        %500 = vst.msk [vmem:[%s165 + $0x160] sm:$0xff] %vm455, %v291
        %501 = vst.msk [vmem:[%s165 + $0x168] sm:$0xff] %vm455, %v292
        %502 = vst.msk [vmem:[%s165 + $0x170] sm:$0xff] %vm455, %v293
        %503 = vst.msk [vmem:[%s165 + $0x178] sm:$0xff] %vm455, %v294
        %504 = vst.msk [vmem:[%s165 + $0x180] sm:$0xff] %vm455, %v311
        %505 = vst.msk [vmem:[%s165 + $0x188] sm:$0xff] %vm455, %v312
        %506 = vst.msk [vmem:[%s165 + $0x190] sm:$0xff] %vm455, %v313
        %507 = vst.msk [vmem:[%s165 + $0x198] sm:$0xff] %vm455, %v314
        %508 = vst.msk [vmem:[%s165 + $0x1a0] sm:$0xff] %vm455, %v315
        %509 = vst.msk [vmem:[%s165 + $0x1a8] sm:$0xff] %vm455, %v316
        %510 = vst.msk [vmem:[%s165 + $0x1b0] sm:$0xff] %vm455, %v317
        %511 = vst.msk [vmem:[%s165 + $0x1b8] sm:$0xff] %vm455, %v318
        %512 = vst.msk [vmem:[%s165 + $0x1c0] sm:$0xff] %vm455, %v319
        %513 = vst.msk [vmem:[%s165 + $0x1c8] sm:$0xff] %vm455, %v320
        %514 = vst.msk [vmem:[%s165 + $0x1d0] sm:$0xff] %vm455, %v321
        %515 = vst.msk [vmem:[%s165 + $0x1d8] sm:$0xff] %vm455, %v322
        %516 = vst.msk [vmem:[%s165 + $0x1e0] sm:$0xff] %vm455, %v323
        %517 = vst.msk [vmem:[%s165 + $0x1e8] sm:$0xff] %vm455, %v324
        %518 = vst.msk [vmem:[%s165 + $0x1f0] sm:$0xff] %vm455, %v325
        %519 = vst.msk [vmem:[%s165 + $0x1f8] sm:$0xff] %vm455, %v326
        %520 = vst.msk [vmem:[%s165 + $0x200] sm:$0xff] %vm455, %v343
        %521 = vst.msk [vmem:[%s165 + $0x208] sm:$0xff] %vm455, %v344
        %522 = vst.msk [vmem:[%s165 + $0x210] sm:$0xff] %vm455, %v345
        %523 = vst.msk [vmem:[%s165 + $0x218] sm:$0xff] %vm455, %v346
        %524 = vst.msk [vmem:[%s165 + $0x220] sm:$0xff] %vm455, %v347
        %525 = vst.msk [vmem:[%s165 + $0x228] sm:$0xff] %vm455, %v348
        %526 = vst.msk [vmem:[%s165 + $0x230] sm:$0xff] %vm455, %v349
        %527 = vst.msk [vmem:[%s165 + $0x238] sm:$0xff] %vm455, %v350
        %528 = vst.msk [vmem:[%s165 + $0x240] sm:$0xff] %vm455, %v351
        %529 = vst.msk [vmem:[%s165 + $0x248] sm:$0xff] %vm455, %v352
        %530 = vst.msk [vmem:[%s165 + $0x250] sm:$0xff] %vm455, %v353
        %531 = vst.msk [vmem:[%s165 + $0x258] sm:$0xff] %vm455, %v354
        %532 = vst.msk [vmem:[%s165 + $0x260] sm:$0xff] %vm455, %v355
        %533 = vst.msk [vmem:[%s165 + $0x268] sm:$0xff] %vm455, %v356
        %534 = vst.msk [vmem:[%s165 + $0x270] sm:$0xff] %vm455, %v357
        %535 = vst.msk [vmem:[%s165 + $0x278] sm:$0xff] %vm455, %v358
        %536 = vst.msk [vmem:[%s165 + $0x280] sm:$0xff] %vm455, %v375
        %537 = vst.msk [vmem:[%s165 + $0x288] sm:$0xff] %vm455, %v376
        %538 = vst.msk [vmem:[%s165 + $0x290] sm:$0xff] %vm455, %v377
        %539 = vst.msk [vmem:[%s165 + $0x298] sm:$0xff] %vm455, %v378
        %540 = vst.msk [vmem:[%s165 + $0x2a0] sm:$0xff] %vm455, %v379
        %541 = vst.msk [vmem:[%s165 + $0x2a8] sm:$0xff] %vm455, %v380
        %542 = vst.msk [vmem:[%s165 + $0x2b0] sm:$0xff] %vm455, %v381
        %543 = vst.msk [vmem:[%s165 + $0x2b8] sm:$0xff] %vm455, %v382
        %544 = vst.msk [vmem:[%s165 + $0x2c0] sm:$0xff] %vm455, %v383
        %545 = vst.msk [vmem:[%s165 + $0x2c8] sm:$0xff] %vm455, %v384
        %546 = vst.msk [vmem:[%s165 + $0x2d0] sm:$0xff] %vm455, %v385
        %547 = vst.msk [vmem:[%s165 + $0x2d8] sm:$0xff] %vm455, %v386
        %548 = vst.msk [vmem:[%s165 + $0x2e0] sm:$0xff] %vm455, %v387
        %549 = vst.msk [vmem:[%s165 + $0x2e8] sm:$0xff] %vm455, %v388
        %550 = vst.msk [vmem:[%s165 + $0x2f0] sm:$0xff] %vm455, %v389
        %551 = vst.msk [vmem:[%s165 + $0x2f8] sm:$0xff] %vm455, %v390
        %552 = vst.msk [vmem:[%s165 + $0x300] sm:$0xff] %vm455, %v407
        %553 = vst.msk [vmem:[%s165 + $0x308] sm:$0xff] %vm455, %v408
        %554 = vst.msk [vmem:[%s165 + $0x310] sm:$0xff] %vm455, %v409
        %555 = vst.msk [vmem:[%s165 + $0x318] sm:$0xff] %vm455, %v410
        %556 = vst.msk [vmem:[%s165 + $0x320] sm:$0xff] %vm455, %v411
        %557 = vst.msk [vmem:[%s165 + $0x328] sm:$0xff] %vm455, %v412
        %558 = vst.msk [vmem:[%s165 + $0x330] sm:$0xff] %vm455, %v413
        %559 = vst.msk [vmem:[%s165 + $0x338] sm:$0xff] %vm455, %v414
        %560 = vst.msk [vmem:[%s165 + $0x340] sm:$0xff] %vm455, %v415
        %561 = vst.msk [vmem:[%s165 + $0x348] sm:$0xff] %vm455, %v416
        %562 = vst.msk [vmem:[%s165 + $0x350] sm:$0xff] %vm455, %v417
        %563 = vst.msk [vmem:[%s165 + $0x358] sm:$0xff] %vm455, %v418
        %564 = vst.msk [vmem:[%s165 + $0x360] sm:$0xff] %vm455, %v419
        %565 = vst.msk [vmem:[%s165 + $0x368] sm:$0xff] %vm455, %v420
        %566 = vst.msk [vmem:[%s165 + $0x370] sm:$0xff] %vm455, %v421
        %567 = vst.msk [vmem:[%s165 + $0x378] sm:$0xff] %vm455, %v422
        %568 = vst.msk [vmem:[%s165 + $0x380] sm:$0xff] %vm455, %v439
        %569 = vst.msk [vmem:[%s165 + $0x388] sm:$0xff] %vm455, %v440
        %570 = vst.msk [vmem:[%s165 + $0x390] sm:$0xff] %vm455, %v441
        %571 = vst.msk [vmem:[%s165 + $0x398] sm:$0xff] %vm455, %v442
        %572 = vst.msk [vmem:[%s165 + $0x3a0] sm:$0xff] %vm455, %v443
        %573 = vst.msk [vmem:[%s165 + $0x3a8] sm:$0xff] %vm455, %v444
        %574 = vst.msk [vmem:[%s165 + $0x3b0] sm:$0xff] %vm455, %v445
        %575 = vst.msk [vmem:[%s165 + $0x3b8] sm:$0xff] %vm455, %v446
        %576 = vst.msk [vmem:[%s165 + $0x3c0] sm:$0xff] %vm455, %v447
        %577 = vst.msk [vmem:[%s165 + $0x3c8] sm:$0xff] %vm455, %v448
        %578 = vst.msk [vmem:[%s165 + $0x3d0] sm:$0xff] %vm455, %v449
        %579 = vst.msk [vmem:[%s165 + $0x3d8] sm:$0xff] %vm455, %v450
        %580 = vst.msk [vmem:[%s165 + $0x3e0] sm:$0xff] %vm455, %v451
        %581 = vst.msk [vmem:[%s165 + $0x3e8] sm:$0xff] %vm455, %v452
        %582 = vst.msk [vmem:[%s165 + $0x3f0] sm:$0xff] %vm455, %v453
        %583 = vst.msk [vmem:[%s165 + $0x3f8] sm:$0xff] %vm455, %v454
        %s584 = smul.u32 128, %s20
        %p585 = scmp.lt.s32.totalorder %s19, 1
        %s586 = scalar_select %p585, %s19, 1
        %p587 = scmp.lt.s32.totalorder %s584, 127
        %s588 = scalar_select %p587, %s584, 127
        %s589 = smul.addr %s586, 128
        %s590 = sadd.s32 %s588, %s589
        %s591 = smul.addr %s590, 8
        %s592 = scalar_lea.vmem %s1, %s591
        // Predicated region
        $region29: #{tpu_custom_call.1} parent=23 // pred_check
          %p593 = pneg %p75
        $region30: #{tpu_custom_call.1} parent=23 // pred_check_branch
          %595 = sbr.rel (%p593) target = $region32
        $region31: #{tpu_custom_call.1} parent=23 // pred_region
          %s596 = smul.u32 128, %s20
        $region32: #{tpu_custom_call.1} parent=23 // pred_fallthru
          _
      $region24: #{tpu_custom_call.1} parent=5 // pred_fallthru
        _
      %p597 = scmp.le.s32.totalorder 2, %s10
      // Predicated region
      $region33: #{tpu_custom_call.1} parent=5 // pred_check
        %p598 = pneg %p597
      $region34: #{tpu_custom_call.1} parent=5 // pred_check_branch
        %600 = sbr.rel (%p598) target = $region36
      $region35: #{tpu_custom_call.1} parent=5 // pred_region
        %s601 = ssub.s32 %s10, 2
        // Predicated region
        $region37: #{tpu_custom_call.1} parent=35 // pred_check
          %p602 = pneg %p81
        $region38: #{tpu_custom_call.1} parent=35 // pred_check_branch
          %604 = sbr.rel (%p602) target = $region40
        $region39: #{tpu_custom_call.1} parent=35 // pred_region
          %s605 = smul.u32 128, %s22
          %p606 = scmp.lt.s32.totalorder %s21, 1
          %s607 = scalar_select %p606, %s21, 1
          %p608 = scmp.lt.s32.totalorder %s605, 127
          %s609 = scalar_select %p608, %s605, 127
          %s610 = smul.addr %s607, 128
          %s611 = sadd.s32 %s609, %s610
          %s612 = smul.addr %s611, 8
          %s613 = scalar_lea.vmem %s1, %s612
        $region40: #{tpu_custom_call.1} parent=35 // pred_fallthru
          _
      $region36: #{tpu_custom_call.1} parent=5 // pred_fallthru
        _
    $region6: #{tpu_custom_call.1} parent=1 // loop_footer
      %s14 = sadd.s32 1, %s10
    $region7: #{tpu_custom_call.1} parent=1 // loop_footer_branch
      %9 = sbr.rel target = $region3
    $region8: #{tpu_custom_call.1} parent=1 // loop_exit
      _
    %614 = vsyncpa [#allocation3], 1
    %s615 = scalar_lea.sflag [#allocation3], 1
    %616 = vsyncpa %s615, 1

</llo_original>
